<compile_context>
chip_gen: v5e
topology: v5e:2x2
jax: 0.10.0
libtpu: 0.0.40
codegen_flags: <defaults>
</compile_context>

<pallas_src>
import functools

import jax
import jax.numpy as jnp
from jax.experimental import pallas as pl
from jax.experimental.pallas import tpu as pltpu


def _make_kernel(wo: int):
    """Stride-2 3x3 conv over one (batch element, output-row block)."""

    def kernel(xm_ref, xh_ref, w_ref, b_ref, o_ref):
        # xm_ref: (Hb, 2, Wq, 2*Cin)   main rows of the de-interleaved padded input:
        #         xm[a, p, c, q*Cin+ci] == x_padded[2*(r*Hb+a)+p, 2*c+q, ci]
        # xh_ref: (2, Wq, 2*Cin)       halo row (global de-interleaved row (r+1)*Hb)
        # w_ref : (9*Cin, Cout_pad)    rows ordered (ky, kx, ci)
        # b_ref : (1, Cout_pad)
        # o_ref : (Hb*Wo, Cout_pad)    rows ordered (ho, wo)
        hb, _, _, two_cin = xm_ref.shape
        cin = two_cin // 2

        def taps_dot(pair2d, last2d, k0):
            # pair2d: (rows, 2*Cin) covers taps (ky, kx=0..1); last2d: (rows, Cin) -> kx=2
            d = jnp.dot(pair2d, w_ref[pl.ds(k0, 2 * cin), :],
                        preferred_element_type=jnp.float32)
            d = d + jnp.dot(last2d, w_ref[pl.ds(k0 + 2 * cin, cin), :],
                            preferred_element_type=jnp.float32)
            return d

        # ky = 0, 1: padded row 2*ho + ky -> (a = ho, p = ky); all rows from main block.
        acc = taps_dot(
            xm_ref[:, 0, pl.ds(0, wo), :].reshape(hb * wo, 2 * cin),
            xm_ref[:, 0, pl.ds(1, wo), pl.ds(0, cin)].reshape(hb * wo, cin),
            0)
        acc = acc + taps_dot(
            xm_ref[:, 1, pl.ds(0, wo), :].reshape(hb * wo, 2 * cin),
            xm_ref[:, 1, pl.ds(1, wo), pl.ds(0, cin)].reshape(hb * wo, cin),
            3 * cin)

        # ky = 2: padded row 2*ho + 2 -> (a = ho + 1, p = 0); the last output row of the
        # block takes its taps from the halo row, all others from main rows 1..Hb-1.
        bot = taps_dot(
            xh_ref[0, pl.ds(0, wo), :],
            xh_ref[0, pl.ds(1, wo), pl.ds(0, cin)],
            6 * cin)
        if hb > 1:
            top = taps_dot(
                xm_ref[pl.ds(1, hb - 1), 0, pl.ds(0, wo), :]
                .reshape((hb - 1) * wo, 2 * cin),
                xm_ref[pl.ds(1, hb - 1), 0, pl.ds(1, wo), pl.ds(0, cin)]
                .reshape((hb - 1) * wo, cin),
                6 * cin)
            acc = acc + jnp.concatenate([top, bot], axis=0)
        else:
            acc = acc + bot

        o_ref[...] = (acc + b_ref[...].astype(jnp.float32)).astype(o_ref.dtype)

    return kernel


def _step_vmem_bytes(hb, wo, wq, cin, cpad, itemsize):
    """Rough live-VMEM bytes for one grid step."""
    m = hb * wo
    return (2 * hb * 2 * wq * 2 * cin * itemsize   # main input block (double-buffered)
            + 2 * 2 * wq * 2 * cin * itemsize       # halo row (double-buffered)
            + 9 * cin * cpad * itemsize             # weights (single buffer)
            + cpad * 4                              # bias
            + 2 * m * cpad * itemsize               # output block (double-buffered)
            + m * cpad * 4)                         # f32 accumulator


def _pick_row_block(ho, wo, wq, cin, cpad, itemsize,
                    budget_bytes=14 << 20, max_rows=4096):
    """Largest row block (divisor of Ho, (8,128)-legal output tile) within the budget."""
    cands = [hb for hb in range(1, ho + 1)
             if ho % hb == 0 and ((hb * wo) % 8 == 0 or hb == ho)]
    fitting = [hb for hb in cands
               if hb * wo <= max_rows
               and _step_vmem_bytes(hb, wo, wq, cin, cpad, itemsize) <= budget_bytes]
    return max(fitting) if fitting else min(cands)


def _resident_spec(block_shape, index_map):
    """Constant-index blocks (weights / bias) only ever need ONE VMEM buffer."""
    try:
        return pl.BlockSpec(block_shape, index_map, pipeline_mode=pl.Buffered(1))
    except (AttributeError, TypeError):   # older JAX without pipeline_mode support
        return pl.BlockSpec(block_shape, index_map)


@functools.partial(jax.jit, static_argnames=("row_block",))
def downsample_forward(x_nchw, weight_oihw, bias, *, row_block=None):
    """DownSample.forward: Conv2d(3x3, padding=1) then nearest 0.5x downsample (NCHW)."""
    N, Cin, H, W = x_nchw.shape
    Cout = weight_oihw.shape[0]
    assert weight_oihw.shape == (Cout, Cin, 3, 3), weight_oihw.shape
    assert H >= 2 and W >= 2, "spatial dims must be >= 2"
    # TODO(synk): only the module defaults are fused (kernel_size=3, padding=1,
    # scale_factor=1/2 nearest); other constructor values need a different kernel.
    Ho, Wo = H // 2, W // 2          # PyTorch nearest 0.5x keeps the even indices

    # ---- single XLA formatting pass: NCHW -> NHWC, pad=1, 2x2 de-interleave --------
    #   xd[n, a, p, c, q*Cin + ci] == x_padded[n, 2a + p, 2c + q, ci]
    # TODO(synk): accepting NHWC activations upstream would remove this extra HBM round
    # trip of the input (matters most on v5e); the module contract is NCHW.
    Hp = H + 2 + (H % 2)             # pad-1 plus one extra zero row/col if odd
    Wp = W + 2 + (W % 2)
    x = jnp.transpose(x_nchw, (0, 2, 3, 1))
    xp = jnp.pad(x, ((0, 0), (1, Hp - H - 1), (1, Wp - W - 1), (0, 0)))
    Hq, Wq = Hp // 2, Wp // 2
    xd = xp.reshape(N, Hq, 2, Wq, 2, Cin).reshape(N, Hq, 2, Wq, 2 * Cin)

    # ---- weights / bias: (ky, kx, ci) row order, Cout padded to a lane multiple ----
    Cpad = ((Cout + 127) // 128) * 128
    wmat = jnp.transpose(weight_oihw, (2, 3, 1, 0)).reshape(9 * Cin, Cout)
    wmat = jnp.pad(wmat, ((0, 0), (0, Cpad - Cout))).astype(x_nchw.dtype)
    b2 = jnp.pad(bias.astype(jnp.float32), (0, Cpad - Cout)).reshape(1, Cpad)

    # ---- row-block tiling sized from a per-step VMEM estimate -----------------------
    itemsize = jnp.dtype(x_nchw.dtype).itemsize
    Hb = (_pick_row_block(Ho, Wo, Wq, Cin, Cpad, itemsize)
          if row_block is None else row_block)
    assert Ho % Hb == 0 and ((Hb * Wo) % 8 == 0 or Hb == Ho), (Hb, Ho, Wo)
    R = Ho // Hb
    M_blk = Hb * Wo

    est = _step_vmem_bytes(Hb, Wo, Wq, Cin, Cpad, itemsize)
    vmem_limit = (None if est <= (12 << 20)
                  else int(min(max(32 << 20, 2 * est), 64 << 20)))

    kernel = _make_kernel(Wo)
    flops = 2 * N * Ho * Wo * 9 * Cin * Cpad
    bytes_accessed = int(xd.size * itemsize + wmat.size * itemsize
                         + N * Ho * Wo * Cpad * itemsize + b2.size * 4)

    out = pl.pallas_call(
        kernel,
        out_shape=jax.ShapeDtypeStruct((N, Ho * Wo, Cpad), x_nchw.dtype),
        grid_spec=pltpu.PrefetchScalarGridSpec(
            num_scalar_prefetch=0,
            grid=(N, R),
            in_specs=[
                # main rows: global de-interleaved rows [r*Hb, (r+1)*Hb)
                pl.BlockSpec((None, Hb, 2, Wq, 2 * Cin),
                             lambda n, r: (n, r, 0, 0, 0)),
                # 1-row halo: global row (r+1)*Hb (block size 1 => block idx == element)
                pl.BlockSpec((None, None, 2, Wq, 2 * Cin),
                             lambda n, r: (n, (r + 1) * Hb, 0, 0, 0)),
                _resident_spec((9 * Cin, Cpad), lambda n, r: (0, 0)),
                _resident_spec((1, Cpad), lambda n, r: (0, 0)),
            ],
            out_specs=pl.BlockSpec((None, M_blk, Cpad), lambda n, r: (n, r, 0)),
        ),
        compiler_params=pltpu.CompilerParams(
            dimension_semantics=("parallel", "parallel"),
            vmem_limit_bytes=vmem_limit),
        cost_estimate=pl.CostEstimate(flops=flops, transcendentals=0,
                                      bytes_accessed=bytes_accessed),
    )(xd, xd, wmat, b2)

    out = out.reshape(N, Ho, Wo, Cpad)[..., :Cout]   # drop Cout lane padding
    return jnp.transpose(out, (0, 3, 1, 2))          # back to NCHW (module contract)


def _reference(x_nchw, weight_oihw, bias):
    """Pure-JAX reference: conv3x3 (pad=1, stride=1) then nearest 0.5x downsample."""
    x = jnp.transpose(x_nchw, (0, 2, 3, 1))
    w = jnp.transpose(weight_oihw, (2, 3, 1, 0))
    conv = jax.lax.conv_general_dilated(
        x, w, window_strides=(1, 1), padding=((1, 1), (1, 1)),
        dimension_numbers=("NHWC", "HWIO", "NHWC"),
        precision=jax.lax.Precision.HIGHEST,
    ) + bias
    down = conv[:, ::2, ::2, :]   # nearest 0.5x keeps even indices
    return jnp.transpose(down, (0, 3, 1, 2))


if __name__ == "__main__":
    # Small shapes consistent with the module: batch=2, in=out channels=4, 16x16.
    N, Cin, Cout, H, W = 2, 4, 4, 16, 16

    key = jax.random.PRNGKey(0)
    k_x, k_w, k_b = jax.random.split(key, 3)

    x = jax.random.normal(k_x, (N, Cin, H, W), dtype=jnp.float32)
    fan_in = Cin * 3 * 3
    bound = 1.0 / (fan_in ** 0.5)
    weight = jax.random.uniform(k_w, (Cout, Cin, 3, 3), jnp.float32, -bound, bound)
    bias = jax.random.uniform(k_b, (Cout,), jnp.float32, -bound, bound)

    ref = _reference(x, weight, bias)

    out = jax.block_until_ready(downsample_forward(x, weight, bias))
    assert out.shape == (N, Cout, H // 2, W // 2), out.shape
    err = float(jnp.max(jnp.abs(out - ref)))
    assert err < 1e-3, f"max abs error {err}"

    # Also exercise the multi-row-block path (spatial grid axis + halo handoff).
    out2 = jax.block_until_ready(downsample_forward(x, weight, bias, row_block=2))
    err2 = float(jnp.max(jnp.abs(out2 - ref)))
    assert err2 < 1e-3, f"max abs error (row_block=2) {err2}"

    print("KERNEL_OK")
</pallas_src>

<mosaic_0001>
module attributes {stable_mosaic.version = 11 : i64} {
  func.func @kernel(%arg0: i32, %arg1: i32, %arg2: memref<1x8x2x9x8xf32, #tpu.memory_space<vmem>>, %arg3: memref<1x1x2x9x8xf32, #tpu.memory_space<vmem>>, %arg4: memref<36x128xf32, #tpu.memory_space<vmem>>, %arg5: memref<1x128xf32, #tpu.memory_space<vmem>>, %arg6: memref<1x64x128xf32, #tpu.memory_space<vmem>>) attributes {dimension_semantics = [#tpu.dimension_semantics<parallel>, #tpu.dimension_semantics<parallel>], iteration_bounds = array<i64: 2, 1>, scalar_prefetch = 0 : i64, scratch_operands = 0 : i64, tpu.core_type = #tpu.core_type<tc>, window_params = [{transform_indices = @transform_0, window_bounds = array<i64: 1, 8, 2, 9, 8>}, {transform_indices = @transform_1, window_bounds = array<i64: 1, 1, 2, 9, 8>}, {pipeline_mode = #tpu.pipeline_mode<synchronous>, transform_indices = @transform_2, window_bounds = array<i64: 36, 128>}, {pipeline_mode = #tpu.pipeline_mode<synchronous>, transform_indices = @transform_3, window_bounds = array<i64: 1, 128>}, {transform_indices = @transform_4, window_bounds = array<i64: 1, 64, 128>}]} {
    %c0 = arith.constant 0 : index
    %c0_0 = arith.constant 0 : index
    %c0_1 = arith.constant 0 : index
    %c0_2 = arith.constant 0 : index
    %c0_3 = arith.constant 0 : index
    %0 = vector.load %arg2[%c0, %c0_0, %c0_1, %c0_2, %c0_3] : memref<1x8x2x9x8xf32, #tpu.memory_space<vmem>>, vector<1x8x1x8x8xf32>
    %1 = vector.shape_cast %0 : vector<1x8x1x8x8xf32> to vector<8x8x8xf32>
    %2 = vector.shape_cast %1 : vector<8x8x8xf32> to vector<64x8xf32>
    %c0_4 = arith.constant 0 : index
    %c0_5 = arith.constant 0 : index
    %c0_6 = arith.constant 0 : index
    %c1 = arith.constant 1 : index
    %c0_7 = arith.constant 0 : index
    %3 = vector.load %arg2[%c0_4, %c0_5, %c0_6, %c1, %c0_7] : memref<1x8x2x9x8xf32, #tpu.memory_space<vmem>>, vector<1x8x1x8x4xf32>
    %4 = vector.shape_cast %3 : vector<1x8x1x8x4xf32> to vector<8x8x4xf32>
    %5 = vector.shape_cast %4 : vector<8x8x4xf32> to vector<64x4xf32>
    %c0_8 = arith.constant 0 : index
    %c0_9 = arith.constant 0 : index
    %6 = vector.load %arg4[%c0_8, %c0_9] : memref<36x128xf32, #tpu.memory_space<vmem>>, vector<8x128xf32>
    %cst = arith.constant dense<0.000000e+00> : vector<64x128xf32>
    %7 = tpu.matmul %2, %6, %cst {dimension_numbers = #tpu.dot_dimension_numbers<[1], [0], [0], [1], [0, 0, 1, 1], [], []>} : vector<64x8xf32>, vector<8x128xf32>, vector<64x128xf32> -> vector<64x128xf32>
    %c8 = arith.constant 8 : index
    %c0_10 = arith.constant 0 : index
    %8 = vector.load %arg4[%c8, %c0_10] : memref<36x128xf32, #tpu.memory_space<vmem>>, vector<4x128xf32>
    %cst_11 = arith.constant dense<0.000000e+00> : vector<64x128xf32>
    %9 = tpu.matmul %5, %8, %cst_11 {dimension_numbers = #tpu.dot_dimension_numbers<[1], [0], [0], [1], [0, 0, 1, 1], [], []>} : vector<64x4xf32>, vector<4x128xf32>, vector<64x128xf32> -> vector<64x128xf32>
    %10 = arith.addf %7, %9 : vector<64x128xf32>
    %c0_12 = arith.constant 0 : index
    %c0_13 = arith.constant 0 : index
    %c1_14 = arith.constant 1 : index
    %c0_15 = arith.constant 0 : index
    %c0_16 = arith.constant 0 : index
    %11 = vector.load %arg2[%c0_12, %c0_13, %c1_14, %c0_15, %c0_16] : memref<1x8x2x9x8xf32, #tpu.memory_space<vmem>>, vector<1x8x1x8x8xf32>
    %12 = vector.shape_cast %11 : vector<1x8x1x8x8xf32> to vector<8x8x8xf32>
    %13 = vector.shape_cast %12 : vector<8x8x8xf32> to vector<64x8xf32>
    %c0_17 = arith.constant 0 : index
    %c0_18 = arith.constant 0 : index
    %c1_19 = arith.constant 1 : index
    %c1_20 = arith.constant 1 : index
    %c0_21 = arith.constant 0 : index
    %14 = vector.load %arg2[%c0_17, %c0_18, %c1_19, %c1_20, %c0_21] : memref<1x8x2x9x8xf32, #tpu.memory_space<vmem>>, vector<1x8x1x8x4xf32>
    %15 = vector.shape_cast %14 : vector<1x8x1x8x4xf32> to vector<8x8x4xf32>
    %16 = vector.shape_cast %15 : vector<8x8x4xf32> to vector<64x4xf32>
    %c12 = arith.constant 12 : index
    %c0_22 = arith.constant 0 : index
    %17 = vector.load %arg4[%c12, %c0_22] : memref<36x128xf32, #tpu.memory_space<vmem>>, vector<8x128xf32>
    %cst_23 = arith.constant dense<0.000000e+00> : vector<64x128xf32>
    %18 = tpu.matmul %13, %17, %cst_23 {dimension_numbers = #tpu.dot_dimension_numbers<[1], [0], [0], [1], [0, 0, 1, 1], [], []>} : vector<64x8xf32>, vector<8x128xf32>, vector<64x128xf32> -> vector<64x128xf32>
    %c20 = arith.constant 20 : index
    %c0_24 = arith.constant 0 : index
    %19 = vector.load %arg4[%c20, %c0_24] : memref<36x128xf32, #tpu.memory_space<vmem>>, vector<4x128xf32>
    %cst_25 = arith.constant dense<0.000000e+00> : vector<64x128xf32>
    %20 = tpu.matmul %16, %19, %cst_25 {dimension_numbers = #tpu.dot_dimension_numbers<[1], [0], [0], [1], [0, 0, 1, 1], [], []>} : vector<64x4xf32>, vector<4x128xf32>, vector<64x128xf32> -> vector<64x128xf32>
    %21 = arith.addf %18, %20 : vector<64x128xf32>
    %22 = arith.addf %10, %21 : vector<64x128xf32>
    %c0_26 = arith.constant 0 : index
    %c0_27 = arith.constant 0 : index
    %c0_28 = arith.constant 0 : index
    %c0_29 = arith.constant 0 : index
    %c0_30 = arith.constant 0 : index
    %23 = vector.load %arg3[%c0_26, %c0_27, %c0_28, %c0_29, %c0_30] : memref<1x1x2x9x8xf32, #tpu.memory_space<vmem>>, vector<1x1x1x8x8xf32>
    %24 = vector.shape_cast %23 : vector<1x1x1x8x8xf32> to vector<8x8xf32>
    %c0_31 = arith.constant 0 : index
    %c0_32 = arith.constant 0 : index
    %c0_33 = arith.constant 0 : index
    %c1_34 = arith.constant 1 : index
    %c0_35 = arith.constant 0 : index
    %25 = vector.load %arg3[%c0_31, %c0_32, %c0_33, %c1_34, %c0_35] : memref<1x1x2x9x8xf32, #tpu.memory_space<vmem>>, vector<1x1x1x8x4xf32>
    %26 = vector.shape_cast %25 : vector<1x1x1x8x4xf32> to vector<8x4xf32>
    %c24 = arith.constant 24 : index
    %c0_36 = arith.constant 0 : index
    %27 = vector.load %arg4[%c24, %c0_36] : memref<36x128xf32, #tpu.memory_space<vmem>>, vector<8x128xf32>
    %cst_37 = arith.constant dense<0.000000e+00> : vector<8x128xf32>
    %28 = tpu.matmul %24, %27, %cst_37 {dimension_numbers = #tpu.dot_dimension_numbers<[1], [0], [0], [1], [0, 0, 1, 1], [], []>} : vector<8x8xf32>, vector<8x128xf32>, vector<8x128xf32> -> vector<8x128xf32>
    %c32 = arith.constant 32 : index
    %c0_38 = arith.constant 0 : index
    %29 = vector.load %arg4[%c32, %c0_38] : memref<36x128xf32, #tpu.memory_space<vmem>>, vector<4x128xf32>
    %cst_39 = arith.constant dense<0.000000e+00> : vector<8x128xf32>
    %30 = tpu.matmul %26, %29, %cst_39 {dimension_numbers = #tpu.dot_dimension_numbers<[1], [0], [0], [1], [0, 0, 1, 1], [], []>} : vector<8x4xf32>, vector<4x128xf32>, vector<8x128xf32> -> vector<8x128xf32>
    %31 = arith.addf %28, %30 : vector<8x128xf32>
    %c0_40 = arith.constant 0 : index
    %c1_41 = arith.constant 1 : index
    %c0_42 = arith.constant 0 : index
    %c0_43 = arith.constant 0 : index
    %c0_44 = arith.constant 0 : index
    %32 = vector.load %arg2[%c0_40, %c1_41, %c0_42, %c0_43, %c0_44] : memref<1x8x2x9x8xf32, #tpu.memory_space<vmem>>, vector<1x7x1x8x8xf32>
    %33 = vector.shape_cast %32 : vector<1x7x1x8x8xf32> to vector<7x8x8xf32>
    %34 = vector.shape_cast %33 : vector<7x8x8xf32> to vector<56x8xf32>
    %c0_45 = arith.constant 0 : index
    %c1_46 = arith.constant 1 : index
    %c0_47 = arith.constant 0 : index
    %c1_48 = arith.constant 1 : index
    %c0_49 = arith.constant 0 : index
    %35 = vector.load %arg2[%c0_45, %c1_46, %c0_47, %c1_48, %c0_49] : memref<1x8x2x9x8xf32, #tpu.memory_space<vmem>>, vector<1x7x1x8x4xf32>
    %36 = vector.shape_cast %35 : vector<1x7x1x8x4xf32> to vector<7x8x4xf32>
    %37 = vector.shape_cast %36 : vector<7x8x4xf32> to vector<56x4xf32>
    %c24_50 = arith.constant 24 : index
    %c0_51 = arith.constant 0 : index
    %38 = vector.load %arg4[%c24_50, %c0_51] : memref<36x128xf32, #tpu.memory_space<vmem>>, vector<8x128xf32>
    %cst_52 = arith.constant dense<0.000000e+00> : vector<56x128xf32>
    %39 = tpu.matmul %34, %38, %cst_52 {dimension_numbers = #tpu.dot_dimension_numbers<[1], [0], [0], [1], [0, 0, 1, 1], [], []>} : vector<56x8xf32>, vector<8x128xf32>, vector<56x128xf32> -> vector<56x128xf32>
    %c32_53 = arith.constant 32 : index
    %c0_54 = arith.constant 0 : index
    %40 = vector.load %arg4[%c32_53, %c0_54] : memref<36x128xf32, #tpu.memory_space<vmem>>, vector<4x128xf32>
    %cst_55 = arith.constant dense<0.000000e+00> : vector<56x128xf32>
    %41 = tpu.matmul %37, %40, %cst_55 {dimension_numbers = #tpu.dot_dimension_numbers<[1], [0], [0], [1], [0, 0, 1, 1], [], []>} : vector<56x4xf32>, vector<4x128xf32>, vector<56x128xf32> -> vector<56x128xf32>
    %42 = arith.addf %39, %41 : vector<56x128xf32>
    %43 = tpu.concatenate %42, %31 in 0 : vector<56x128xf32>, vector<8x128xf32> -> vector<64x128xf32>
    %44 = arith.addf %22, %43 : vector<64x128xf32>
    %c0_56 = arith.constant 0 : index
    %c0_57 = arith.constant 0 : index
    %45 = vector.load %arg5[%c0_56, %c0_57] : memref<1x128xf32, #tpu.memory_space<vmem>>, vector<1x128xf32>
    %46 = vector.broadcast %45 : vector<1x128xf32> to vector<64x128xf32>
    %47 = arith.addf %44, %46 : vector<64x128xf32>
    %c0_58 = arith.constant 0 : index
    %c0_59 = arith.constant 0 : index
    %c0_60 = arith.constant 0 : index
    %48 = vector.load %arg6[%c0_58, %c0_59, %c0_60] : memref<1x64x128xf32, #tpu.memory_space<vmem>>, vector<1x64x128xf32>
    %49 = vector.shape_cast %48 : vector<1x64x128xf32> to vector<64x128xf32>
    %50 = vector.shape_cast %47 : vector<64x128xf32> to vector<1x64x128xf32>
    tpu.vector_store %arg6[%c0_58, %c0_59, %c0_60], %50 {strides = array<i32>} : memref<1x64x128xf32, #tpu.memory_space<vmem>>, vector<1x64x128xf32>,
    return
  }
  func.func @transform_0(%arg0: i32, %arg1: i32) -> (i32, i32, i32, i32, i32) {
    %c0_i32 = arith.constant 0 : i32
    %c0_i32_0 = arith.constant 0 : i32
    %c0_i32_1 = arith.constant 0 : i32
    %c0_i32_2 = arith.constant 0 : i32
    return %arg0, %arg1, %c0_i32, %c0_i32_0, %c0_i32_1 : i32, i32, i32, i32, i32
  }
  func.func @transform_1(%arg0: i32, %arg1: i32) -> (i32, i32, i32, i32, i32) {
    %c1_i32 = arith.constant 1 : i32
    %0 = arith.addi %arg1, %c1_i32 : i32
    %c8_i32 = arith.constant 8 : i32
    %1 = arith.muli %0, %c8_i32 : i32
    %c0_i32 = arith.constant 0 : i32
    %c0_i32_0 = arith.constant 0 : i32
    %c0_i32_1 = arith.constant 0 : i32
    %c0_i32_2 = arith.constant 0 : i32
    return %arg0, %1, %c0_i32, %c0_i32_0, %c0_i32_1 : i32, i32, i32, i32, i32
  }
  func.func @transform_2(%arg0: i32, %arg1: i32) -> (i32, i32) {
    %c0_i32 = arith.constant 0 : i32
    %c0_i32_0 = arith.constant 0 : i32
    %c0_i32_1 = arith.constant 0 : i32
    return %c0_i32, %c0_i32_0 : i32, i32
  }
  func.func @transform_3(%arg0: i32, %arg1: i32) -> (i32, i32) {
    %c0_i32 = arith.constant 0 : i32
    %c0_i32_0 = arith.constant 0 : i32
    %c0_i32_1 = arith.constant 0 : i32
    return %c0_i32, %c0_i32_0 : i32, i32
  }
  func.func @transform_4(%arg0: i32, %arg1: i32) -> (i32, i32, i32) {
    %c0_i32 = arith.constant 0 : i32
    %c0_i32_0 = arith.constant 0 : i32
    return %arg0, %arg1, %c0_i32 : i32, i32, i32
  }
}

</mosaic_0001>

<llo_original>
// kernel: downsample_forward.1
$region0: #{downsample_forward.1}
  #allocation0 [shape = 'u32[]', space=smem, size = 0x4, offset = 0x4, fixed_abs, tag = 'smem constant byte address 0x4 - core index']
  #allocation1 [shape = 'u32[72,128]{1,0:T(1,128)}', space=vmem, size = 0x9000, scoped, tag = 'internal scratch']
  %s0 = inlined_call_operand.vmem [shape: f32[2,9,2,9,8], index: 0, kind: input, shape index: {}, may-alias: {0,1}]
  %s1 = inlined_call_operand.vmem [shape: f32[2,9,2,9,8], index: 1, kind: input, shape index: {}, may-alias: {0,1}]
  %s2 = inlined_call_operand.vmem [shape: f32[36,128], index: 2, kind: input, shape index: {}]
  %s3 = inlined_call_operand.vmem [shape: f32[1,128], index: 3, kind: input, shape index: {}]
  %s4 = inlined_call_operand.vmem [shape: f32[2,64,128], index: 4, kind: output, shape index: {}]
  %s5 = sld [smem:[#allocation0]]
  $region49: #{downsample_forward.1} parent=0
    _
  %s7 = ssub.s32 1, %s5
  %s8 = scalar_select 0, %s7, %s5
  loop: start=0, step=1, limit=4
  $region2: #{downsample_forward.1} parent=0 // loop_pre_header
    _
  $region3: #{downsample_forward.1} parent=0 // loop_header
    %s10 = sphi 0, %s14
    %p11 = scmp.ge.s32.totalorder %s10, 4
    %s17 = sphi 0, %s29
    %s18 = sphi 0, %s25
    %s19 = sphi 0, %s17
    %s20 = sphi 0, %s18
    %s21 = sphi 0, %s19
    %s22 = sphi 0, %s20
    %s34 = sphi 0, %s36
    %s37 = sphi 0, %s34
    %s38 = sphi 0, %s37
    %s54 = sphi 0, %s38
    %s66 = sphi 0, %s68
    %s69 = sphi 0, %s66
    %s70 = sphi 0, %s69
    %s86 = sphi 0, %s70
    %s90 = sphi 0, %s90
    %s92 = sphi 0, %s90
    %s93 = sphi 0, %s92
    %s107 = sphi 0, %s93
    %s111 = sphi 0, %s111
    %s113 = sphi 0, %s111
    %s114 = sphi 0, %s113
    %s128 = sphi 0, %s114
    %s136 = sphi 0, %s138
    %s139 = sphi 0, %s136
    %s140 = sphi 0, %s139
    %s156 = sphi 0, %s140
  $region4: #{downsample_forward.1} parent=0 // loop_header_branch
    %13 = sbr.rel (%p11) target = $region8
  $region5: #{downsample_forward.1} parent=0 // loop_body
    %s15 = ssub.s32 %s10, 1
    %s16 = ssub.s32 %s10, 2
    %s23 = sadd.s32 1, %s18
    %p24 = scmp.ge.s32.totalorder %s23, 1
    %s25 = scalar_select %p24, 0, %s23
    %s26 = sadd.s32 1, %s17
    %s27 = scalar_select %p24, %s26, %s17
    %p28 = scmp.ge.s32.totalorder %s27, 2
    %s29 = scalar_select %p28, 0, %s27
    %s30 = ssub.s32 %s17, %s29
    %s31 = ssub.s32 %s18, %s25
    %s32 = sor.u32 %s30, %s31
    %p33 = scmp.eq.s32.totalorder %s32, 0
    %s35 = sadd.s32 %s34, 1
    %s36 = scalar_select %p33, %s34, %s35
    %p39 = pneg %p33
    %p40 = scmp.eq.s32.totalorder %s10, 1
    %p41 = por %p39, %p40
    %p42 = scmp.ne.s32.totalorder %s34, %s37
    %p43 = scmp.eq.s32.totalorder %s10, 0
    %p44 = por %p42, %p43
    %p45 = scmp.ne.s32.totalorder %s34, %s37
    %p46 = scmp.eq.s32.totalorder %s15, 1
    %p47 = por %p45, %p46
    %p48 = scmp.ne.s32.totalorder %s37, %s38
    %p49 = scmp.eq.s32.totalorder %s15, 0
    %p50 = por %p48, %p49
    %p51 = scmp.ne.s32.totalorder %s37, %s38
    %p52 = scmp.eq.s32.totalorder %s16, 1
    %p53 = por %p51, %p52
    %p55 = scmp.ne.s32.totalorder %s38, %s54
    %p56 = scmp.eq.s32.totalorder %s16, 0
    %p57 = por %p55, %p56
    %s58 = sadd.s32 %s18, 1
    %s59 = smul.u32 %s58, 8
    %s60 = sadd.s32 %s25, 1
    %s61 = smul.u32 %s60, 8
    %s62 = ssub.s32 %s17, %s29
    %s63 = ssub.s32 %s59, %s61
    %s64 = sor.u32 %s62, %s63
    %p65 = scmp.eq.s32.totalorder %s64, 0
    %s67 = sadd.s32 %s66, 1
    %s68 = scalar_select %p65, %s66, %s67
    %p71 = pneg %p65
    %p72 = scmp.eq.s32.totalorder %s10, 1
    %p73 = por %p71, %p72
    %p74 = scmp.ne.s32.totalorder %s66, %s69
    %p75 = scmp.eq.s32.totalorder %s10, 0
    %p76 = por %p74, %p75
    %p77 = scmp.ne.s32.totalorder %s66, %s69
    %p78 = scmp.eq.s32.totalorder %s15, 1
    %p79 = por %p77, %p78
    %p80 = scmp.ne.s32.totalorder %s69, %s70
    %p81 = scmp.eq.s32.totalorder %s15, 0
    %p82 = por %p80, %p81
    %p83 = scmp.ne.s32.totalorder %s69, %s70
    %p84 = scmp.eq.s32.totalorder %s16, 1
    %p85 = por %p83, %p84
    %p87 = scmp.ne.s32.totalorder %s70, %s86
    %p88 = scmp.eq.s32.totalorder %s16, 0
    %p89 = por %p87, %p88
    %s91 = sadd.s32 %s90, 1
    %p94 = scmp.eq.s32.totalorder %s10, 1
    %p95 = scmp.ne.s32.totalorder %s90, %s92
    %p96 = scmp.eq.s32.totalorder %s10, 0
    %p97 = por %p95, %p96
    %p98 = scmp.ne.s32.totalorder %s90, %s92
    %p99 = scmp.eq.s32.totalorder %s15, 1
    %p100 = por %p98, %p99
    %p101 = scmp.ne.s32.totalorder %s92, %s93
    %p102 = scmp.eq.s32.totalorder %s15, 0
    %p103 = por %p101, %p102
    %p104 = scmp.ne.s32.totalorder %s92, %s93
    %p105 = scmp.eq.s32.totalorder %s16, 1
    %p106 = por %p104, %p105
    %p108 = scmp.ne.s32.totalorder %s93, %s107
    %p109 = scmp.eq.s32.totalorder %s16, 0
    %p110 = por %p108, %p109
    %s112 = sadd.s32 %s111, 1
    %p115 = scmp.eq.s32.totalorder %s10, 1
    %p116 = scmp.ne.s32.totalorder %s111, %s113
    %p117 = scmp.eq.s32.totalorder %s10, 0
    %p118 = por %p116, %p117
    %p119 = scmp.ne.s32.totalorder %s111, %s113
    %p120 = scmp.eq.s32.totalorder %s15, 1
    %p121 = por %p119, %p120
    %p122 = scmp.ne.s32.totalorder %s113, %s114
    %p123 = scmp.eq.s32.totalorder %s15, 0
    %p124 = por %p122, %p123
    %p125 = scmp.ne.s32.totalorder %s113, %s114
    %p126 = scmp.eq.s32.totalorder %s16, 1
    %p127 = por %p125, %p126
    %p129 = scmp.ne.s32.totalorder %s114, %s128
    %p130 = scmp.eq.s32.totalorder %s16, 0
    %p131 = por %p129, %p130
    %s132 = ssub.s32 %s17, %s29
    %s133 = ssub.s32 %s18, %s25
    %s134 = sor.u32 %s132, %s133
    %p135 = scmp.eq.s32.totalorder %s134, 0
    %s137 = sadd.s32 %s136, 1
    %s138 = scalar_select %p135, %s136, %s137
    %p141 = pneg %p135
    %p142 = scmp.eq.s32.totalorder %s10, 1
    %p143 = por %p141, %p142
    %p144 = scmp.ne.s32.totalorder %s136, %s139
    %p145 = scmp.eq.s32.totalorder %s10, 0
    %p146 = por %p144, %p145
    %p147 = scmp.ne.s32.totalorder %s136, %s139
    %p148 = scmp.eq.s32.totalorder %s15, 1
    %p149 = por %p147, %p148
    %p150 = scmp.ne.s32.totalorder %s139, %s140
    %p151 = scmp.eq.s32.totalorder %s15, 0
    %p152 = por %p150, %p151
    %p153 = scmp.ne.s32.totalorder %s139, %s140
    %p154 = scmp.eq.s32.totalorder %s16, 1
    %p155 = por %p153, %p154
    %p157 = scmp.ne.s32.totalorder %s140, %s156
    %p158 = scmp.eq.s32.totalorder %s16, 0
    %p159 = por %p157, %p158
    %p160 = scmp.le.s32.totalorder 1, %s10
    %p161 = scmp.lt.s32.totalorder %s10, 3
    %p162 = pnand %p160, %p161
    %p163 = pneg %p162
    // Predicated region
    $region9: #{downsample_forward.1} parent=5 // pred_check
      _
    $region10: #{downsample_forward.1} parent=5 // pred_check_branch
      %165 = sbr.rel (%p162) target = $region12
    $region11: #{downsample_forward.1} parent=5 // pred_region
      %s166 = ssub.s32 %s10, 1
      // Predicated region
      $region13: #{downsample_forward.1} parent=11 // pred_check
        %p167 = pneg %p103
      $region14: #{downsample_forward.1} parent=11 // pred_check_branch
        %169 = sbr.rel (%p167) target = $region16
      $region15: #{downsample_forward.1} parent=11 // pred_region
        _
      $region16: #{downsample_forward.1} parent=11 // pred_fallthru
        _
      // Predicated region
      $region17: #{downsample_forward.1} parent=11 // pred_check
        %p170 = pneg %p124
      $region18: #{downsample_forward.1} parent=11 // pred_check_branch
        %172 = sbr.rel (%p170) target = $region20
      $region19: #{downsample_forward.1} parent=11 // pred_region
        _
      $region20: #{downsample_forward.1} parent=11 // pred_fallthru
        _
    $region12: #{downsample_forward.1} parent=5 // pred_fallthru
      _
    %p173 = scmp.lt.s32.totalorder %s10, 2
    // Predicated region
    $region21: #{downsample_forward.1} parent=5 // pred_check
      %p174 = pneg %p173
    $region22: #{downsample_forward.1} parent=5 // pred_check_branch
      %176 = sbr.rel (%p174) target = $region24
    $region23: #{downsample_forward.1} parent=5 // pred_region
      // Predicated region
      $region25: #{downsample_forward.1} parent=23 // pred_check
        %p177 = pneg %p44
      $region26: #{downsample_forward.1} parent=23 // pred_check_branch
        %179 = sbr.rel (%p177) target = $region28
      $region27: #{downsample_forward.1} parent=23 // pred_region
        %s180 = smul.u32 8, %s18
        %s181 = ssub.s32 9, %s180
        %p182 = scmp.lt.s32.totalorder %s181, 8
        %s183 = scalar_select %p182, %s181, 8
        %s184 = smul.u32 8, %s183
        %s185 = smul.u32 %s184, 2
        %s186 = smul.u32 %s185, 2
        %p187 = scmp.lt.s32.totalorder %s17, 1
        %s188 = scalar_select %p187, %s17, 1
        %p189 = scmp.lt.s32.totalorder %s180, 8
        %s190 = scalar_select %p189, %s180, 8
        %s191 = smul.addr %s190, 4
        %s192 = smul.addr %s188, 36
        %s193 = sadd.s32 %s191, %s192
        %s194 = smul.addr %s193, 8
        %s195 = scalar_lea.vmem %s0, %s194
        %s196 = smul.u32 8, %s18
        %s197 = ssub.s32 9, %s196
        %p198 = scmp.lt.s32.totalorder %s197, 8
        %s199 = scalar_select %p198, %s197, 8
        %s200 = smul.u32 8, %s199
        %s201 = smul.u32 %s200, 2
        %s202 = smul.u32 %s201, 2
      $region28: #{downsample_forward.1} parent=23 // pred_fallthru
        _
      // Predicated region
      $region29: #{downsample_forward.1} parent=23 // pred_check
        %p203 = pneg %p76
      $region30: #{downsample_forward.1} parent=23 // pred_check_branch
        %205 = sbr.rel (%p203) target = $region32
      $region31: #{downsample_forward.1} parent=23 // pred_region
        %s206 = sadd.s32 %s18, 1
        %s207 = smul.u32 %s206, 8
        %p208 = scmp.lt.s32.totalorder %s17, 1
        %s209 = scalar_select %p208, %s17, 1
        %p210 = scmp.lt.s32.totalorder %s207, 8
        %s211 = scalar_select %p210, %s207, 8
        %s212 = smul.addr %s211, 4
        %s213 = smul.addr %s209, 36
        %s214 = sadd.s32 %s212, %s213
        %s215 = smul.addr %s214, 8
        %s216 = scalar_lea.vmem %s1, %s215
        %s217 = sadd.s32 %s18, 1
        %s218 = smul.u32 %s217, 8
      $region32: #{downsample_forward.1} parent=23 // pred_fallthru
        _
    $region24: #{downsample_forward.1} parent=5 // pred_fallthru
      _
    %p219 = scmp.le.s32.totalorder 1, %s10
    %p220 = scmp.lt.s32.totalorder %s10, 3
    %p221 = pnand %p219, %p220
    %p222 = pneg %p221
    // Predicated region
    $region33: #{downsample_forward.1} parent=5 // pred_check
      _
    $region34: #{downsample_forward.1} parent=5 // pred_check_branch
      %224 = sbr.rel (%p221) target = $region36
    $region35: #{downsample_forward.1} parent=5 // pred_region
      %s225 = ssub.s32 %s10, 1
      %s226 = smul.u32 8, %s20
      %s227 = ssub.s32 9, %s226
      %p228 = scmp.lt.s32.totalorder %s227, 8
      %s229 = scalar_select %p228, %s227, 8
      %s230 = smul.u32 8, %s229
      %s231 = smul.u32 %s230, 2
      %s232 = smul.u32 %s231, 2
      %p233 = scmp.lt.s32.totalorder %s19, 1
      %s234 = scalar_select %p233, %s19, 1
      %p235 = scmp.lt.s32.totalorder %s226, 8
      %s236 = scalar_select %p235, %s226, 8
      %s237 = smul.addr %s236, 4
      %s238 = smul.addr %s234, 36
      %s239 = sadd.s32 %s237, %s238
      %s240 = smul.addr %s239, 8
      %s241 = scalar_lea.vmem %s0, %s240
      %p242 = pneg %p50
      %p243 = pneg %p47
      %s244 = sadd.s32 %s20, 1
      %s245 = smul.u32 %s244, 8
      %p246 = scmp.lt.s32.totalorder %s19, 1
      %s247 = scalar_select %p246, %s19, 1
      %p248 = scmp.lt.s32.totalorder %s245, 8
      %s249 = scalar_select %p248, %s245, 8
      %s250 = smul.addr %s249, 4
      %s251 = smul.addr %s247, 36
      %s252 = sadd.s32 %s250, %s251
      %s253 = smul.addr %s252, 8
      %s254 = scalar_lea.vmem %s1, %s253
      %p255 = pneg %p82
      %p256 = pneg %p79
      %p257 = pneg %p103
      %p258 = pneg %p100
      %p259 = pneg %p124
      %p260 = pneg %p121
      %p261 = pneg %p152
      %p262 = pneg %p149
      %s263 = smul.u32 8, %s20
      %p264 = scmp.lt.s32.totalorder %s19, 1
      %s265 = scalar_select %p264, %s19, 1
      %p266 = scmp.lt.s32.totalorder %s263, 7
      %s267 = scalar_select %p266, %s263, 7
      %s268 = smul.addr %s265, 8
      %s269 = sadd.s32 %s267, %s268
      %s270 = smul.addr %s269, 8
      %s271 = scalar_lea.vmem %s4, %s270
      %s272 = smul.u32 8, %s20
      %s273 = ssub.s32 9, %s272
      %p274 = scmp.lt.s32.totalorder %s273, 8
      %s275 = scalar_select %p274, %s273, 8
      %s276 = smul.u32 8, %s275
      %s277 = smul.u32 %s276, 2
      %s278 = smul.u32 %s277, 2
      %p279 = scmp.lt.s32.totalorder %s19, 1
      %s280 = scalar_select %p279, %s19, 1
      %p281 = scmp.lt.s32.totalorder %s272, 8
      %s282 = scalar_select %p281, %s272, 8
      %s283 = smul.addr %s282, 4
      %s284 = smul.addr %s280, 36
      %s285 = sadd.s32 %s283, %s284
      %s286 = smul.addr %s285, 8
      %s287 = scalar_lea.vmem %s0, %s286
      %s288 = smul.u32 8, %s20
      %s289 = ssub.s32 9, %s288
      %p290 = scmp.lt.s32.totalorder %s289, 8
      %s291 = scalar_select %p290, %s289, 8
      %s292 = smul.u32 8, %s291
      %s293 = smul.u32 %s292, 2
      %s294 = smul.u32 %s293, 2
      %s295 = sadd.s32 %s20, 1
      %s296 = smul.u32 %s295, 8
      %p297 = scmp.lt.s32.totalorder %s19, 1
      %s298 = scalar_select %p297, %s19, 1
      %p299 = scmp.lt.s32.totalorder %s296, 8
      %s300 = scalar_select %p299, %s296, 8
      %s301 = smul.addr %s300, 4
      %s302 = smul.addr %s298, 36
      %s303 = sadd.s32 %s301, %s302
      %s304 = smul.addr %s303, 8
      %s305 = scalar_lea.vmem %s1, %s304
      %s306 = sadd.s32 %s20, 1
      %s307 = smul.u32 %s306, 8
      %s308 = smul.u32 8, %s20
      %p309 = scmp.lt.s32.totalorder %s19, 1
      %s310 = scalar_select %p309, %s19, 1
      %p311 = scmp.lt.s32.totalorder %s308, 7
      %s312 = scalar_select %p311, %s308, 7
      %s313 = smul.addr %s310, 8
      %s314 = sadd.s32 %s312, %s313
      %s315 = smul.addr %s314, 8
      %s316 = scalar_lea.vmem %s4, %s315
      %s317 = smul.u32 8, %s20
      %v318 = vld [vmem:[%s287] sm:$0xff]
      %v319 = vld [vmem:[%s287 + $0x20] sm:$0xff]
      %v320 = vld [vmem:[%s287 + $0x40] sm:$0xff]
      %v321 = vld [vmem:[%s287 + $0x60] sm:$0xff]
      %v322 = vld [vmem:[%s287 + $0x80] sm:$0xff]
      %v323 = vld [vmem:[%s287 + $0xa0] sm:$0xff]
      %v324 = vld [vmem:[%s287 + $0xc0] sm:$0xff]
      %v325 = vld [vmem:[%s287 + $0xe0] sm:$0xff]
      %v326 = vld [vmem:[%s287 + $0x1] sm:$0xff]
      %v327 = vld [vmem:[%s287 + $0x21] sm:$0xff]
      %v328 = vld [vmem:[%s287 + $0x41] sm:$0xff]
      %v329 = vld [vmem:[%s287 + $0x61] sm:$0xff]
      %v330 = vld [vmem:[%s287 + $0x81] sm:$0xff]
      %v331 = vld [vmem:[%s287 + $0xa1] sm:$0xff]
      %v332 = vld [vmem:[%s287 + $0xc1] sm:$0xff]
      %v333 = vld [vmem:[%s287 + $0xe1] sm:$0xff]
      %v334 = vld [vmem:[%s2] sm:$0xff]
      %v335 = vld [vmem:[%s2 + $0x8] sm:$0xf]
      %vm336 = vcmask 31744
      %v338 = vsel %vm336, %v326, 0
      %v341 = vsel %vm336, %v327, 0
      %v344 = vsel %vm336, %v328, 0
      %v347 = vsel %vm336, %v329, 0
      %v350 = vsel %vm336, %v330, 0
      %v353 = vsel %vm336, %v331, 0
      %v356 = vsel %vm336, %v332, 0
      %v359 = vsel %vm336, %v333, 0
      %vm361 = vcmask 1043456
      %v363 = vsel %vm361, %v335, 0
      %365 = vmatpush.msra.mxu0 0.0
      %366 = vmatpush.msra.mxu0 0.0
      %367 = vmatpush.msra.mxu0 0.0
      %368 = vmatpush.msra.mxu0 0.0
      %369 = vmatpush.msra.mxu0 0.0
      %370 = vmatpush.msra.mxu0 0.0
      %371 = vmatpush.msra.mxu0 0.0
      %372 = vmatpush.msra.mxu0 0.0
      %373 = vmatpush.msra.mxu0 0.0
      %374 = vmatpush.msra.mxu0 0.0
      %375 = vmatpush.msra.mxu0 0.0
      %376 = vmatpush.msra.mxu0 0.0
      %377 = vmatpush.msra.mxu0 0.0
      %378 = vmatpush.msra.mxu0 0.0
      %379 = vmatpush.msra.mxu0 0.0
      %380 = vmatpush.msra.mxu0 %v363
      %381 = vmatmul.f32.gmra.mxu0 %v338
      %v382 = vpop.f32.mrf.mxu0
      %v383 = vadd.f32 0.0, %v382
      %384 = vmatmul.f32.gmra.mxu0 %v341
      %v385 = vpop.f32.mrf.mxu0
      %v386 = vadd.f32 0.0, %v385
      %387 = vmatmul.f32.gmra.mxu0 %v344
      %v388 = vpop.f32.mrf.mxu0
      %v389 = vadd.f32 0.0, %v388
      %390 = vmatmul.f32.gmra.mxu0 %v347
      %v391 = vpop.f32.mrf.mxu0
      %v392 = vadd.f32 0.0, %v391
      %393 = vmatmul.f32.gmra.mxu0 %v350
      %v394 = vpop.f32.mrf.mxu0
      %v395 = vadd.f32 0.0, %v394
      %396 = vmatmul.f32.gmra.mxu0 %v353
      %v397 = vpop.f32.mrf.mxu0
      %v398 = vadd.f32 0.0, %v397
      %399 = vmatmul.f32.gmra.mxu0 %v356
      %v400 = vpop.f32.mrf.mxu0
      %v401 = vadd.f32 0.0, %v400
      %402 = vmatmul.f32.gmra.mxu0 %v359
      %v403 = vpop.f32.mrf.mxu0
      %v404 = vadd.f32 0.0, %v403
      %405 = vdwg.mxu0
      %vm406 = vcmask 64512
      %v408 = vsel %vm406, %v318, 0
      %v411 = vsel %vm406, %v319, 0
      %v414 = vsel %vm406, %v320, 0
      %v417 = vsel %vm406, %v321, 0
      %v420 = vsel %vm406, %v322, 0
      %v423 = vsel %vm406, %v323, 0
      %v426 = vsel %vm406, %v324, 0
      %v429 = vsel %vm406, %v325, 0
      %431 = vmatpush.msra.mxu0 0.0
      %432 = vmatpush.msra.mxu0 0.0
      %433 = vmatpush.msra.mxu0 0.0
      %434 = vmatpush.msra.mxu0 0.0
      %435 = vmatpush.msra.mxu0 0.0
      %436 = vmatpush.msra.mxu0 0.0
      %437 = vmatpush.msra.mxu0 0.0
      %438 = vmatpush.msra.mxu0 0.0
      %439 = vmatpush.msra.mxu0 0.0
      %440 = vmatpush.msra.mxu0 0.0
      %441 = vmatpush.msra.mxu0 0.0
      %442 = vmatpush.msra.mxu0 0.0
      %443 = vmatpush.msra.mxu0 0.0
      %444 = vmatpush.msra.mxu0 0.0
      %445 = vmatpush.msra.mxu0 0.0
      %446 = vmatpush.msra.mxu0 %v334
      %447 = vmatmul.f32.gmra.mxu0 %v408
      %v448 = vpop.f32.mrf.mxu0
      %v449 = vadd.f32 %v383, %v448
      %450 = vmatmul.f32.gmra.mxu0 %v411
      %v451 = vpop.f32.mrf.mxu0
      %v452 = vadd.f32 %v386, %v451
      %453 = vmatmul.f32.gmra.mxu0 %v414
      %v454 = vpop.f32.mrf.mxu0
      %v455 = vadd.f32 %v389, %v454
      %456 = vmatmul.f32.gmra.mxu0 %v417
      %v457 = vpop.f32.mrf.mxu0
      %v458 = vadd.f32 %v392, %v457
      %459 = vmatmul.f32.gmra.mxu0 %v420
      %v460 = vpop.f32.mrf.mxu0
      %v461 = vadd.f32 %v395, %v460
      %462 = vmatmul.f32.gmra.mxu0 %v423
      %v463 = vpop.f32.mrf.mxu0
      %v464 = vadd.f32 %v398, %v463
      %465 = vmatmul.f32.gmra.mxu0 %v426
      %v466 = vpop.f32.mrf.mxu0
      %v467 = vadd.f32 %v401, %v466
      %468 = vmatmul.f32.gmra.mxu0 %v429
      %v469 = vpop.f32.mrf.mxu0
      %v470 = vadd.f32 %v404, %v469
      %471 = vdwg.mxu0
      %s472 = scalar_lea.vmem %s287, 16
      %v473 = vld [vmem:[%s472] sm:$0xff]
      %v474 = vld [vmem:[%s472 + $0x20] sm:$0xff]
      %v475 = vld [vmem:[%s472 + $0x40] sm:$0xff]
      %v476 = vld [vmem:[%s472 + $0x60] sm:$0xff]
      %v477 = vld [vmem:[%s472 + $0x80] sm:$0xff]
      %v478 = vld [vmem:[%s472 + $0xa0] sm:$0xff]
      %v479 = vld [vmem:[%s472 + $0xc0] sm:$0xff]
      %v480 = vld [vmem:[%s472 + $0xe0] sm:$0xff]
      %v481 = vld [vmem:[%s472 + $0x1] sm:$0xff]
      %v482 = vld [vmem:[%s472 + $0x21] sm:$0xff]
      %v483 = vld [vmem:[%s472 + $0x41] sm:$0xff]
      %v484 = vld [vmem:[%s472 + $0x61] sm:$0xff]
      %v485 = vld [vmem:[%s472 + $0x81] sm:$0xff]
      %v486 = vld [vmem:[%s472 + $0xa1] sm:$0xff]
      %v487 = vld [vmem:[%s472 + $0xc1] sm:$0xff]
      %v488 = vld [vmem:[%s472 + $0xe1] sm:$0xff]
      %v489 = vld [vmem:[%s2 + $0xc] sm:$0xff]
      %v490 = vld [vmem:[%s2 + $0x14] sm:$0xf]
      %v492 = vsel %vm336, %v481, 0
      %v495 = vsel %vm336, %v482, 0
      %v498 = vsel %vm336, %v483, 0
      %v501 = vsel %vm336, %v484, 0
      %v504 = vsel %vm336, %v485, 0
      %v507 = vsel %vm336, %v486, 0
      %v510 = vsel %vm336, %v487, 0
      %v513 = vsel %vm336, %v488, 0
      %v516 = vsel %vm361, %v490, 0
      %518 = vmatpush.msra.mxu0 0.0
      %519 = vmatpush.msra.mxu0 0.0
      %520 = vmatpush.msra.mxu0 0.0
      %521 = vmatpush.msra.mxu0 0.0
      %522 = vmatpush.msra.mxu0 0.0
      %523 = vmatpush.msra.mxu0 0.0
      %524 = vmatpush.msra.mxu0 0.0
      %525 = vmatpush.msra.mxu0 0.0
      %526 = vmatpush.msra.mxu0 0.0
      %527 = vmatpush.msra.mxu0 0.0
      %528 = vmatpush.msra.mxu0 0.0
      %529 = vmatpush.msra.mxu0 0.0
      %530 = vmatpush.msra.mxu0 0.0
      %531 = vmatpush.msra.mxu0 0.0
      %532 = vmatpush.msra.mxu0 0.0
      %533 = vmatpush.msra.mxu0 %v516
      %534 = vmatmul.f32.gmra.mxu0 %v492
      %v535 = vpop.f32.mrf.mxu0
      %v536 = vadd.f32 0.0, %v535
      %537 = vmatmul.f32.gmra.mxu0 %v495
      %v538 = vpop.f32.mrf.mxu0
      %v539 = vadd.f32 0.0, %v538
      %540 = vmatmul.f32.gmra.mxu0 %v498
      %v541 = vpop.f32.mrf.mxu0
      %v542 = vadd.f32 0.0, %v541
      %543 = vmatmul.f32.gmra.mxu0 %v501
      %v544 = vpop.f32.mrf.mxu0
      %v545 = vadd.f32 0.0, %v544
      %546 = vmatmul.f32.gmra.mxu0 %v504
      %v547 = vpop.f32.mrf.mxu0
      %v548 = vadd.f32 0.0, %v547
      %549 = vmatmul.f32.gmra.mxu0 %v507
      %v550 = vpop.f32.mrf.mxu0
      %v551 = vadd.f32 0.0, %v550
      %552 = vmatmul.f32.gmra.mxu0 %v510
      %v553 = vpop.f32.mrf.mxu0
      %v554 = vadd.f32 0.0, %v553
      %555 = vmatmul.f32.gmra.mxu0 %v513
      %v556 = vpop.f32.mrf.mxu0
      %v557 = vadd.f32 0.0, %v556
      %558 = vdwg.mxu0
      %v560 = vsel %vm406, %v473, 0
      %v563 = vsel %vm406, %v474, 0
      %v566 = vsel %vm406, %v475, 0
      %v569 = vsel %vm406, %v476, 0
      %v572 = vsel %vm406, %v477, 0
      %v575 = vsel %vm406, %v478, 0
      %v578 = vsel %vm406, %v479, 0
      %v581 = vsel %vm406, %v480, 0
      %583 = vmatpush.msra.mxu0 0.0
      %584 = vmatpush.msra.mxu0 0.0
      %585 = vmatpush.msra.mxu0 0.0
      %586 = vmatpush.msra.mxu0 0.0
      %587 = vmatpush.msra.mxu0 0.0
      %588 = vmatpush.msra.mxu0 0.0
      %589 = vmatpush.msra.mxu0 0.0
      %590 = vmatpush.msra.mxu0 0.0
      %591 = vmatpush.msra.mxu0 0.0
      %592 = vmatpush.msra.mxu0 0.0
      %593 = vmatpush.msra.mxu0 0.0
      %594 = vmatpush.msra.mxu0 0.0
      %595 = vmatpush.msra.mxu0 0.0
      %596 = vmatpush.msra.mxu0 0.0
      %597 = vmatpush.msra.mxu0 0.0
      %598 = vmatpush.msra.mxu0 %v489
      %599 = vmatmul.f32.gmra.mxu0 %v560
      %v600 = vpop.f32.mrf.mxu0
      %v601 = vadd.f32 %v536, %v600
      %602 = vmatmul.f32.gmra.mxu0 %v563
      %v603 = vpop.f32.mrf.mxu0
      %v604 = vadd.f32 %v539, %v603
      %605 = vmatmul.f32.gmra.mxu0 %v566
      %v606 = vpop.f32.mrf.mxu0
      %v607 = vadd.f32 %v542, %v606
      %608 = vmatmul.f32.gmra.mxu0 %v569
      %v609 = vpop.f32.mrf.mxu0
      %v610 = vadd.f32 %v545, %v609
      %611 = vmatmul.f32.gmra.mxu0 %v572
      %v612 = vpop.f32.mrf.mxu0
      %v613 = vadd.f32 %v548, %v612
      %614 = vmatmul.f32.gmra.mxu0 %v575
      %v615 = vpop.f32.mrf.mxu0
      %v616 = vadd.f32 %v551, %v615
      %617 = vmatmul.f32.gmra.mxu0 %v578
      %v618 = vpop.f32.mrf.mxu0
      %v619 = vadd.f32 %v554, %v618
      %620 = vmatmul.f32.gmra.mxu0 %v581
      %v621 = vpop.f32.mrf.mxu0
      %v622 = vadd.f32 %v557, %v621
      %623 = vdwg.mxu0
      %v624 = vadd.f32 %v449, %v601
      %v625 = vadd.f32 %v452, %v604
      %v626 = vadd.f32 %v455, %v607
      %v627 = vadd.f32 %v458, %v610
      %v628 = vadd.f32 %v461, %v613
      %v629 = vadd.f32 %v464, %v616
      %v630 = vadd.f32 %v467, %v619
      %v631 = vadd.f32 %v470, %v622
      %v632 = vld [vmem:[%s305] sm:$0xff]
      %v633 = vld [vmem:[%s305 + $0x1] sm:$0xff]
      %v634 = vld [vmem:[%s2 + $0x18] sm:$0xff]
      %v635 = vld [vmem:[%s2 + $0x20] sm:$0xf]
      %v637 = vsel %vm336, %v633, 0
      %v640 = vsel %vm361, %v635, 0
      %642 = vmatpush.msra.mxu0 0.0
      %643 = vmatpush.msra.mxu0 0.0
      %644 = vmatpush.msra.mxu0 0.0
      %645 = vmatpush.msra.mxu0 0.0
      %646 = vmatpush.msra.mxu0 0.0
      %647 = vmatpush.msra.mxu0 0.0
      %648 = vmatpush.msra.mxu0 0.0
      %649 = vmatpush.msra.mxu0 0.0
      %650 = vmatpush.msra.mxu0 0.0
      %651 = vmatpush.msra.mxu0 0.0
      %652 = vmatpush.msra.mxu0 0.0
      %653 = vmatpush.msra.mxu0 0.0
      %654 = vmatpush.msra.mxu0 0.0
      %655 = vmatpush.msra.mxu0 0.0
      %656 = vmatpush.msra.mxu0 0.0
      %657 = vmatpush.msra.mxu0 %v640
      %658 = vmatmul.f32.gmra.mxu0 %v637
      %v659 = vpop.f32.mrf.mxu0
      %v660 = vadd.f32 0.0, %v659
      %661 = vdwg.mxu0
      %v663 = vsel %vm406, %v632, 0
      %665 = vmatpush.msra.mxu0 0.0
      %666 = vmatpush.msra.mxu0 0.0
      %667 = vmatpush.msra.mxu0 0.0
      %668 = vmatpush.msra.mxu0 0.0
      %669 = vmatpush.msra.mxu0 0.0
      %670 = vmatpush.msra.mxu0 0.0
      %671 = vmatpush.msra.mxu0 0.0
      %672 = vmatpush.msra.mxu0 0.0
      %673 = vmatpush.msra.mxu0 0.0
      %674 = vmatpush.msra.mxu0 0.0
      %675 = vmatpush.msra.mxu0 0.0
      %676 = vmatpush.msra.mxu0 0.0
      %677 = vmatpush.msra.mxu0 0.0
      %678 = vmatpush.msra.mxu0 0.0
      %679 = vmatpush.msra.mxu0 0.0
      %680 = vmatpush.msra.mxu0 %v634
      %681 = vmatmul.f32.gmra.mxu0 %v663
      %v682 = vpop.f32.mrf.mxu0
      %v683 = vadd.f32 %v660, %v682
      %684 = vdwg.mxu0
      %s685 = scalar_lea.vmem %s287, 32
      %v686 = vld [vmem:[%s685] sm:$0xff]
      %v687 = vld [vmem:[%s685 + $0x20] sm:$0xff]
      %v688 = vld [vmem:[%s685 + $0x40] sm:$0xff]
      %v689 = vld [vmem:[%s685 + $0x60] sm:$0xff]
      %v690 = vld [vmem:[%s685 + $0x80] sm:$0xff]
      %v691 = vld [vmem:[%s685 + $0xa0] sm:$0xff]
      %v692 = vld [vmem:[%s685 + $0xc0] sm:$0xff]
      %v693 = vld [vmem:[%s685 + $0x1] sm:$0xff]
      %v694 = vld [vmem:[%s685 + $0x21] sm:$0xff]
      %v695 = vld [vmem:[%s685 + $0x41] sm:$0xff]
      %v696 = vld [vmem:[%s685 + $0x61] sm:$0xff]
      %v697 = vld [vmem:[%s685 + $0x81] sm:$0xff]
      %v698 = vld [vmem:[%s685 + $0xa1] sm:$0xff]
      %v699 = vld [vmem:[%s685 + $0xc1] sm:$0xff]
      %v701 = vsel %vm336, %v693, 0
      %v704 = vsel %vm336, %v694, 0
      %v707 = vsel %vm336, %v695, 0
      %v710 = vsel %vm336, %v696, 0
      %v713 = vsel %vm336, %v697, 0
      %v716 = vsel %vm336, %v698, 0
      %v719 = vsel %vm336, %v699, 0
      %721 = vmatpush.msra.mxu0 0.0
      %722 = vmatpush.msra.mxu0 0.0
      %723 = vmatpush.msra.mxu0 0.0
      %724 = vmatpush.msra.mxu0 0.0
      %725 = vmatpush.msra.mxu0 0.0
      %726 = vmatpush.msra.mxu0 0.0
      %727 = vmatpush.msra.mxu0 0.0
      %728 = vmatpush.msra.mxu0 0.0
      %729 = vmatpush.msra.mxu0 0.0
      %730 = vmatpush.msra.mxu0 0.0
      %731 = vmatpush.msra.mxu0 0.0
      %732 = vmatpush.msra.mxu0 0.0
      %733 = vmatpush.msra.mxu0 0.0
      %734 = vmatpush.msra.mxu0 0.0
      %735 = vmatpush.msra.mxu0 0.0
      %736 = vmatpush.msra.mxu0 %v640
      %737 = vmatmul.f32.gmra.mxu0 %v701
      %v738 = vpop.f32.mrf.mxu0
      %v739 = vadd.f32 0.0, %v738
      %740 = vmatmul.f32.gmra.mxu0 %v704
      %v741 = vpop.f32.mrf.mxu0
      %v742 = vadd.f32 0.0, %v741
      %743 = vmatmul.f32.gmra.mxu0 %v707
      %v744 = vpop.f32.mrf.mxu0
      %v745 = vadd.f32 0.0, %v744
      %746 = vmatmul.f32.gmra.mxu0 %v710
      %v747 = vpop.f32.mrf.mxu0
      %v748 = vadd.f32 0.0, %v747
      %749 = vmatmul.f32.gmra.mxu0 %v713
      %v750 = vpop.f32.mrf.mxu0
      %v751 = vadd.f32 0.0, %v750
      %752 = vmatmul.f32.gmra.mxu0 %v716
      %v753 = vpop.f32.mrf.mxu0
      %v754 = vadd.f32 0.0, %v753
      %755 = vmatmul.f32.gmra.mxu0 %v719
      %v756 = vpop.f32.mrf.mxu0
      %v757 = vadd.f32 0.0, %v756
      %758 = vdwg.mxu0
      %v760 = vsel %vm406, %v686, 0
      %v763 = vsel %vm406, %v687, 0
      %v766 = vsel %vm406, %v688, 0
      %v769 = vsel %vm406, %v689, 0
      %v772 = vsel %vm406, %v690, 0
      %v775 = vsel %vm406, %v691, 0
      %v778 = vsel %vm406, %v692, 0
      %780 = vmatpush.msra.mxu0 0.0
      %781 = vmatpush.msra.mxu0 0.0
      %782 = vmatpush.msra.mxu0 0.0
      %783 = vmatpush.msra.mxu0 0.0
      %784 = vmatpush.msra.mxu0 0.0
      %785 = vmatpush.msra.mxu0 0.0
      %786 = vmatpush.msra.mxu0 0.0
      %787 = vmatpush.msra.mxu0 0.0
      %788 = vmatpush.msra.mxu0 0.0
      %789 = vmatpush.msra.mxu0 0.0
      %790 = vmatpush.msra.mxu0 0.0
      %791 = vmatpush.msra.mxu0 0.0
      %792 = vmatpush.msra.mxu0 0.0
      %793 = vmatpush.msra.mxu0 0.0
      %794 = vmatpush.msra.mxu0 0.0
      %795 = vmatpush.msra.mxu0 %v634
      %796 = vmatmul.f32.gmra.mxu0 %v760
      %v797 = vpop.f32.mrf.mxu0
      %v798 = vadd.f32 %v739, %v797
      %799 = vmatmul.f32.gmra.mxu0 %v763
      %v800 = vpop.f32.mrf.mxu0
      %v801 = vadd.f32 %v742, %v800
      %802 = vmatmul.f32.gmra.mxu0 %v766
      %v803 = vpop.f32.mrf.mxu0
      %v804 = vadd.f32 %v745, %v803
      %805 = vmatmul.f32.gmra.mxu0 %v769
      %v806 = vpop.f32.mrf.mxu0
      %v807 = vadd.f32 %v748, %v806
      %808 = vmatmul.f32.gmra.mxu0 %v772
      %v809 = vpop.f32.mrf.mxu0
      %v810 = vadd.f32 %v751, %v809
      %811 = vmatmul.f32.gmra.mxu0 %v775
      %v812 = vpop.f32.mrf.mxu0
      %v813 = vadd.f32 %v754, %v812
      %814 = vmatmul.f32.gmra.mxu0 %v778
      %v815 = vpop.f32.mrf.mxu0
      %v816 = vadd.f32 %v757, %v815
      %817 = vdwg.mxu0
      %v818 = vadd.f32 %v624, %v798
      %v819 = vadd.f32 %v625, %v801
      %v820 = vadd.f32 %v626, %v804
      %v821 = vadd.f32 %v627, %v807
      %v822 = vadd.f32 %v628, %v810
      %v823 = vadd.f32 %v629, %v813
      %v824 = vadd.f32 %v630, %v816
      %v825 = vadd.f32 %v631, %v683
      %v826 = vld [vmem:[%s3] sm:$0x1]
      %v828 = vperm.slane %v826, 0
      %v830 = vadd.f32 %v818, %v828
      %v831 = vadd.f32 %v819, %v828
      %v832 = vadd.f32 %v820, %v828
      %v833 = vadd.f32 %v821, %v828
      %v834 = vadd.f32 %v822, %v828
      %v835 = vadd.f32 %v823, %v828
      %v836 = vadd.f32 %v824, %v828
      %v837 = vadd.f32 %v825, %v828
      %838 = vst [vmem:[%s316] sm:$0xff] %v830
      %839 = vst [vmem:[%s316 + $0x8] sm:$0xff] %v831
      %840 = vst [vmem:[%s316 + $0x10] sm:$0xff] %v832
      %841 = vst [vmem:[%s316 + $0x18] sm:$0xff] %v833
      %842 = vst [vmem:[%s316 + $0x20] sm:$0xff] %v834
      %843 = vst [vmem:[%s316 + $0x28] sm:$0xff] %v835
      %844 = vst [vmem:[%s316 + $0x30] sm:$0xff] %v836
      %845 = vst [vmem:[%s316 + $0x38] sm:$0xff] %v837
      %s846 = smul.u32 8, %s20
      %p847 = scmp.lt.s32.totalorder %s19, 1
      %s848 = scalar_select %p847, %s19, 1
      %p849 = scmp.lt.s32.totalorder %s846, 7
      %s850 = scalar_select %p849, %s846, 7
      %s851 = smul.addr %s848, 8
      %s852 = sadd.s32 %s850, %s851
      %s853 = smul.addr %s852, 8
      %s854 = scalar_lea.vmem %s4, %s853
      // Predicated region
      $region37: #{downsample_forward.1} parent=35 // pred_check
        %p855 = pneg %p149
      $region38: #{downsample_forward.1} parent=35 // pred_check_branch
        %857 = sbr.rel (%p855) target = $region40
      $region39: #{downsample_forward.1} parent=35 // pred_region
        %s858 = smul.u32 8, %s20
      $region40: #{downsample_forward.1} parent=35 // pred_fallthru
        _
    $region36: #{downsample_forward.1} parent=5 // pred_fallthru
      _
    %p859 = scmp.le.s32.totalorder 2, %s10
    // Predicated region
    $region41: #{downsample_forward.1} parent=5 // pred_check
      %p860 = pneg %p859
    $region42: #{downsample_forward.1} parent=5 // pred_check_branch
      %862 = sbr.rel (%p860) target = $region44
    $region43: #{downsample_forward.1} parent=5 // pred_region
      %s863 = ssub.s32 %s10, 2
      // Predicated region
      $region45: #{downsample_forward.1} parent=43 // pred_check
        %p864 = pneg %p155
      $region46: #{downsample_forward.1} parent=43 // pred_check_branch
        %866 = sbr.rel (%p864) target = $region48
      $region47: #{downsample_forward.1} parent=43 // pred_region
        %s867 = smul.u32 8, %s22
        %p868 = scmp.lt.s32.totalorder %s21, 1
        %s869 = scalar_select %p868, %s21, 1
        %p870 = scmp.lt.s32.totalorder %s867, 7
        %s871 = scalar_select %p870, %s867, 7
        %s872 = smul.addr %s869, 8
        %s873 = sadd.s32 %s871, %s872
        %s874 = smul.addr %s873, 8
        %s875 = scalar_lea.vmem %s4, %s874
      $region48: #{downsample_forward.1} parent=43 // pred_fallthru
        _
    $region44: #{downsample_forward.1} parent=5 // pred_fallthru
      _
  $region6: #{downsample_forward.1} parent=0 // loop_footer
    %s14 = sadd.s32 1, %s10
  $region7: #{downsample_forward.1} parent=0 // loop_footer_branch
    %9 = sbr.rel target = $region3
  $region8: #{downsample_forward.1} parent=0 // loop_exit
    _

</llo_original>
